<compile_context>
chip_gen: v6e
topology: v6e:2x2x1
jax: 0.10.0
libtpu: 0.0.40
codegen_flags: <defaults>
</compile_context>

<pallas_src>
import math

import numpy as np
import jax
import jax.numpy as jnp
from jax.experimental import pallas as pl
from jax.experimental.pallas import tpu as pltpu

_LANE = 128            # last dim multiple of 128 -> unmasked lane-dense vst
_MAX_BLOCK_ROWS = 512  # 512x128 f32 = 256 KiB/tile; double-buffered in+out
                       # ~= 1 MiB VMEM, far under v7x's 64 MiB physical VMEM.


def _copy_kernel(x_ref, o_ref):
    # Pure pass-through: the only "compute" the reference forward could imply.
    o_ref[...] = x_ref[...]


def _passthrough_2d(x2d: jax.Array, block_rows: int) -> jax.Array:
    rows, _ = x2d.shape
    grid = rows // block_rows
    return pl.pallas_call(
        _copy_kernel,
        out_shape=jax.ShapeDtypeStruct(x2d.shape, x2d.dtype),
        grid=(grid,),
        in_specs=[pl.BlockSpec((block_rows, _LANE), lambda i: (i, 0))],
        out_specs=pl.BlockSpec((block_rows, _LANE), lambda i: (i, 0)),
        # Alias output HBM buffer to the (internal) input slab: halves the
        # HBM footprint and avoids a second allocation.
        input_output_aliases={0: 0},
        compiler_params=pltpu.CompilerParams(
            # Embarrassingly parallel row axis: shards across v7x's 2 TCs,
            # harmless on v5e/v6e (1 TC).
            dimension_semantics=("parallel",),
        ),
    )(x2d)


@jax.jit
def pallas_passthrough(x: jax.Array) -> jax.Array:
    """Identity pass-through of `x` via a tiled, lane-dense Pallas TPU kernel."""
    orig_shape = x.shape
    n = math.prod(orig_shape)
    # Lane-dense view: fold everything into (rows, 128) so stores are
    # full-width vst, not masked vst.msk partial stores.
    rows = pl.cdiv(n, _LANE)
    # Rows per block: multiple of 8 (sublane), capped at the VMEM sweet spot
    # so the same tiling fits all of v5e / v6e / v7x with 2-deep pipelining.
    block_rows = min(_MAX_BLOCK_ROWS, ((rows + 7) // 8) * 8)
    padded_rows = pl.cdiv(rows, block_rows) * block_rows
    pad = padded_rows * _LANE - n
    flat = x.reshape(-1)
    if pad:
        flat = jnp.pad(flat, (0, pad))
    out2d = _passthrough_2d(flat.reshape(padded_rows, _LANE), block_rows)
    return out2d.reshape(-1)[:n].reshape(orig_shape)


class DLASeg:
    """JAX/Pallas port of the (stub) PyTorch DLASeg module."""

    def __init__(self, last_level: int, down_ratio: int = 2):
        assert down_ratio in [2, 4, 8, 16]
        self.first_level: int = int(np.log2(down_ratio))
        self.last_level: int = last_level

    def forward(self, x: jax.Array):
        # TODO(synk): the reference forward() is a stub (no compute on x);
        # per perf review the self-imposed identity copy and the per-call
        # host sync were removed, so forward does zero device work — exactly
        # matching the PyTorch semantics of returning [ {} ].
        del x
        z: dict = {}
        return [z]

    __call__ = forward


if __name__ == "__main__":
    key = jax.random.PRNGKey(0)
    # Small NCHW input consistent with a detection backbone stem.
    x = jax.random.normal(key, (2, 4, 16, 16), dtype=jnp.float32)

    model = DLASeg(last_level=5, down_ratio=2)
    out = model(x)

    # Semantic checks against the PyTorch reference: forward returns [ {} ].
    assert isinstance(out, list) and len(out) == 1
    assert isinstance(out[0], dict) and len(out[0]) == 0
    assert model.first_level == 1 and model.last_level == 5

    # Run the Pallas pass-through kernel once on TPU and verify round-trip.
    y = pallas_passthrough(x)
    jax.block_until_ready(y)
    assert y.shape == x.shape and y.dtype == x.dtype
    assert bool(jnp.allclose(y, x))

    print("KERNEL_OK")
</pallas_src>

<mosaic_0001>
module attributes {stable_mosaic.version = 11 : i64} {
  func.func @_copy_kernel(%arg0: i32, %arg1: memref<16x128xf32, #tpu.memory_space<vmem>>, %arg2: memref<16x128xf32, #tpu.memory_space<vmem>>) attributes {dimension_semantics = [#tpu.dimension_semantics<parallel>], iteration_bounds = array<i64: 1>, scalar_prefetch = 0 : i64, scratch_operands = 0 : i64, tpu.core_type = #tpu.core_type<tc>, window_params = [{transform_indices = @transform_0, window_bounds = array<i64: 16, 128>}, {transform_indices = @transform_1, window_bounds = array<i64: 16, 128>}]} {
    %c0 = arith.constant 0 : index
    %c0_0 = arith.constant 0 : index
    %0 = vector.load %arg1[%c0, %c0_0] : memref<16x128xf32, #tpu.memory_space<vmem>>, vector<16x128xf32>
    %c0_1 = arith.constant 0 : index
    %c0_2 = arith.constant 0 : index
    %1 = vector.load %arg2[%c0_1, %c0_2] : memref<16x128xf32, #tpu.memory_space<vmem>>, vector<16x128xf32>
    tpu.vector_store %arg2[%c0_1, %c0_2], %0 {strides = array<i32>} : memref<16x128xf32, #tpu.memory_space<vmem>>, vector<16x128xf32>,
    return
  }
  func.func @transform_0(%arg0: i32) -> (i32, i32) {
    %c0_i32 = arith.constant 0 : i32
    %c0_i32_0 = arith.constant 0 : i32
    return %arg0, %c0_i32 : i32, i32
  }
  func.func @transform_1(%arg0: i32) -> (i32, i32) {
    %c0_i32 = arith.constant 0 : i32
    %c0_i32_0 = arith.constant 0 : i32
    return %arg0, %c0_i32 : i32, i32
  }
}

</mosaic_0001>

<llo_original>
// kernel: pallas_passthrough.1
$region0: #{pallas_passthrough.1}
  #allocation0 [shape = 'u32[]', space=smem, size = 0x4, offset = 0x4, fixed_abs, tag = 'smem constant byte address 0x4 - core index']
  #allocation1 [shape = 'u32[144,128]{1,0:T(1,128)}', space=vmem, size = 0x12000, scoped, tag = 'internal scratch']
  %s0 = inlined_call_operand.vmem [shape: f32[16,128], index: 0, kind: input, shape index: {}, may-alias: {0,1}]
  %s1 = inlined_call_operand.vmem [shape: f32[16,128], index: 1, kind: output, shape index: {}, may-alias: {0,1}]
  %s2 = sld [smem:[#allocation0]]
  $region14: #{pallas_passthrough.1} parent=0
    _
  %s4 = ssub.s32 1, %s2
  %s5 = scalar_select 0, %s4, %s2
  // Predicated region
  $region2: #{pallas_passthrough.1} parent=0 // pred_check
    _
  $region3: #{pallas_passthrough.1} parent=0 // pred_check_branch
    %7 = sbr.rel (0) target = $region5
  $region4: #{pallas_passthrough.1} parent=0 // pred_region
    _
  $region5: #{pallas_passthrough.1} parent=0 // pred_fallthru
    _
  %v8 = vld [vmem:[%s0] sm:$0xff]
  %v9 = vld [vmem:[%s0 + $0x8] sm:$0xff]
  %10 = vst [vmem:[%s1] sm:$0xff] %v8
  %11 = vst [vmem:[%s1 + $0x8] sm:$0xff] %v9
  // Predicated region
  $region6: #{pallas_passthrough.1} parent=0 // pred_check
    _
  $region7: #{pallas_passthrough.1} parent=0 // pred_check_branch
    %13 = sbr.rel (0) target = $region9
  $region8: #{pallas_passthrough.1} parent=0 // pred_region
    _
  $region9: #{pallas_passthrough.1} parent=0 // pred_fallthru
    _
  // Predicated region
  $region10: #{pallas_passthrough.1} parent=0 // pred_check
    _
  $region11: #{pallas_passthrough.1} parent=0 // pred_check_branch
    %15 = sbr.rel (0) target = $region13
  $region12: #{pallas_passthrough.1} parent=0 // pred_region
    _
  $region13: #{pallas_passthrough.1} parent=0 // pred_fallthru
    _

</llo_original>
